<compile_context>
chip_gen: v7x
topology: tpu7x:2x2x1
jax: 0.10.0
libtpu: 0.0.40
codegen_flags: <defaults>
</compile_context>

<pallas_src>
import functools
import math

import jax
import jax.numpy as jnp
from jax.experimental import pallas as pl
from jax.experimental.pallas import tpu as pltpu


def _selective_kernel_body(x1_ref, x2_ref, x3_ref, w1r_ref, b1_ref, w2_ref,
                           b2_ref, sel_ref, selt_ref, ohc_ref, o_ref, *,
                           inv_hw, total_rows, block_rows, mask_tail):
    # x*_ref / o_ref : (tb*C, HW)  merged (batch*channel, spatial) rows
    # w1r_ref        : (tb*C, M)   == tile(W1, (tb, 1))    (affine1 weight)
    # b1_ref / w2_ref / b2_ref : (1, M) / (M, C) / (1, C)
    # sel_ref (tb, tb*C), selt_ref (tb*C, tb), ohc_ref (tb*C, C): 0/1 constants
    x1 = x1_ref[...]
    x2 = x2_ref[...]
    x3 = x3_ref[...]
    sum_u = x1 + x2 + x3                                        # (tb*C, HW)

    # adaptive_avg_pool2d((1,1)) == spatial mean: one scalar per (b, c) row.
    row_mean = jnp.sum(sum_u, axis=-1, keepdims=True) * inv_hw  # (tb*C, 1)

    if mask_tail:
        # Partial last block: zero garbage rows so they cannot leak NaN/Inf
        # into valid batches through the sel matmul below.  The corresponding
        # output rows are masked on store anyway.
        i = pl.program_id(0)
        valid = total_rows - i * block_rows
        rid = jax.lax.broadcasted_iota(jnp.int32, (block_rows, 1), 0)
        row_mean = jnp.where(rid < valid, row_mean, 0.0)

    # affine1 folded into row space:
    #   z[t] = relu(sum_c squeeze[t, c] * W1[c, :] + b1)
    #        = relu(sel @ (row_mean * tile(W1)) + b1)
    y = row_mean * w1r_ref[...]                                 # (tb*C, M)
    z = jnp.dot(sel_ref[...], y,
                preferred_element_type=jnp.float32) + b1_ref[...]
    z = jnp.maximum(z, 0.0)                                     # (tb, M)

    # affine2; softmax(cat([a,a,a], dim=1)) == softmax(a)/3 with identical gates
    # for the three branches, so out = (x1+x2+x3) * softmax(a)/3.
    a = jnp.dot(z, w2_ref[...],
                preferred_element_type=jnp.float32) + b2_ref[...]   # (tb, C)
    a = a - jnp.max(a, axis=-1, keepdims=True)
    e = jnp.exp(a)
    gate = e / (3.0 * jnp.sum(e, axis=-1, keepdims=True))       # (tb, C)

    # Scatter the per-(batch, channel) gate back to one scalar per merged row:
    #   g_rows[r] = gate[r // C, r % C]
    g_rows = jnp.sum(
        jnp.dot(selt_ref[...], gate, preferred_element_type=jnp.float32)
        * ohc_ref[...], axis=-1, keepdims=True)                 # (tb*C, 1)

    o_ref[...] = (sum_u * g_rows).astype(o_ref.dtype)


def selective_kernel_forward(x1, x2, x3, w1, b1, w2, b2):
    """x1, x2, x3: (B, C, H, W) float32.  Returns (B, C, H, W)."""
    B, C, H, W = x1.shape
    HW = H * W
    M = w1.shape[1]
    R = B * C
    b1 = b1.reshape(1, M)
    b2 = b2.reshape(1, C)

    # Merged (batch*channel, spatial) views: free reshapes, no pad/slice passes.
    x1f = x1.reshape(R, HW)
    x2f = x2.reshape(R, HW)
    x3f = x3.reshape(R, HW)

    # ---- chip-aware VMEM budget / limit / megacore split ----
    try:
        kind = jax.devices()[0].device_kind.lower()
    except Exception:
        kind = ""
    is_v7 = "v7" in kind
    big_vmem = (("v5" in kind) or ("v6" in kind)) and not is_v7
    if big_vmem:                       # v5e / v6e: 128 MiB VMEM, 1 TensorCore
        vmem_budget = 64 * 1024 * 1024
        vmem_limit = 96 * 1024 * 1024
    else:                              # v7x (64 MiB) or unknown: conservative
        vmem_budget = 32 * 1024 * 1024
        vmem_limit = 48 * 1024 * 1024

    # ---- block (row-tile) selection ----
    itemsize = x1.dtype.itemsize
    lanes = pl.cdiv(HW, 128) * 128            # lane footprint of one VMEM row
    # 3 inputs + 1 output, double-buffered -> 8 resident slabs per block.
    bytes_per_row = 8 * lanes * itemsize
    # Batches per block so that tb*C is a multiple of 8 (dense sublanes).
    sub_step = ((8 * C) // math.gcd(8, C)) // C           # lcm(8, C) // C

    tb_fit = int(vmem_budget // bytes_per_row) - 7        # rows (8-pad bound)
    tb_fit = max(tb_fit // C, 1)
    # Cap rows/block so the gate-plumbing matrices (O(tb^2 * C)) and per-block
    # MXU work stay negligible; blocks are already large enough to amortize the
    # ~0.35us per-grid-step overhead.
    tb_fit = min(tb_fit, max(1024 // C, 1), 256)

    if tb_fit >= B:
        tb = B
    elif tb_fit >= sub_step:
        tb = (tb_fit // sub_step) * sub_step
    else:
        # Smallest sublane-dense block exceeds the soft budget; rely on the
        # vmem_limit headroom rather than emitting masked 4-sublane stores.
        # TODO(synk): two-pass fallback for shapes where even this overflows.
        tb = min(sub_step, B)

    # v7x has 2 TensorCores: split a single-block grid into >=2 parallel steps
    # when that keeps dense sublanes (no-op on 1-TC v5e/v6e).
    if is_v7 and tb == B and B > 1:
        half = pl.cdiv(pl.cdiv(B, 2), sub_step) * sub_step
        if half < B:
            tb = half

    tb_rows = tb * C
    grid = (pl.cdiv(B, tb),)

    # ---- small constant matrices for the (B*C, 1) <-> (B, C) gate plumbing ----
    rows = jnp.arange(tb_rows, dtype=jnp.int32)
    bidx = rows // C                                       # batch index per row
    tvec = jnp.arange(tb, dtype=jnp.int32)
    cvec = jnp.arange(C, dtype=jnp.int32)
    sel = (bidx[None, :] == tvec[:, None]).astype(jnp.float32)        # (tb, tb*C)
    selt = (bidx[:, None] == tvec[None, :]).astype(jnp.float32)       # (tb*C, tb)
    ohc = ((rows % C)[:, None] == cvec[None, :]).astype(jnp.float32)  # (tb*C, C)
    w1_rows = jnp.tile(w1.astype(jnp.float32), (tb, 1))               # (tb*C, M)

    x_spec = pl.BlockSpec((tb_rows, HW), lambda i: (i, 0))

    def _const_spec(shape):
        return pl.BlockSpec(shape, lambda i: (0,) * len(shape))

    kernel = functools.partial(
        _selective_kernel_body,
        inv_hw=1.0 / HW,
        total_rows=R,
        block_rows=tb_rows,
        mask_tail=(B % tb != 0),
    )

    out = pl.pallas_call(
        kernel,
        out_shape=jax.ShapeDtypeStruct((R, HW), x1.dtype),
        grid=grid,
        in_specs=[x_spec, x_spec, x_spec,
                  _const_spec(w1_rows.shape), _const_spec(b1.shape),
                  _const_spec(w2.shape), _const_spec(b2.shape),
                  _const_spec(sel.shape), _const_spec(selt.shape),
                  _const_spec(ohc.shape)],
        out_specs=x_spec,
        compiler_params=pltpu.CompilerParams(
            dimension_semantics=("parallel",),
            vmem_limit_bytes=vmem_limit),
    )(x1f, x2f, x3f, w1_rows, b1, w2, b2, sel, selt, ohc)

    return out.reshape(B, C, H, W)


def _reference_forward(x1, x2, x3, w1, b1, w2, b2):
    """Pure-JAX mirror of the PyTorch forward (unsimplified) for validation."""
    sum_u = x1 + x2 + x3
    squeeze = jnp.mean(sum_u, axis=(2, 3))                   # (B, C)
    z = jax.nn.relu(squeeze @ w1 + b1)                       # (B, M)
    a = z @ w2 + b2                                          # (B, C)
    logits = jnp.concatenate([a, a, a], axis=1)              # (B, 3C)
    sm = jax.nn.softmax(logits, axis=1)
    C = a.shape[1]
    a1 = sm[:, 0:C][:, :, None, None]
    a2 = sm[:, C:2 * C][:, :, None, None]
    a3 = sm[:, 2 * C:3 * C][:, :, None, None]
    return x1 * a1 + x2 * a2 + x3 * a3


if __name__ == "__main__":
    B, C, H, W = 2, 4, 16, 16      # out_c = C = 4
    MIDDLE = 32

    key = jax.random.PRNGKey(0)
    k1, k2, k3, kw1, kb1, kw2, kb2 = jax.random.split(key, 7)

    sk_conv1 = jax.random.normal(k1, (B, C, H, W), dtype=jnp.float32)
    sk_conv2 = jax.random.normal(k2, (B, C, H, W), dtype=jnp.float32)
    sk_conv3 = jax.random.normal(k3, (B, C, H, W), dtype=jnp.float32)

    # nn.Linear(out_c, middle): weight (middle, out_c); w1 = weight.T with
    # PyTorch-style uniform(-1/sqrt(fan_in), 1/sqrt(fan_in)) init.
    bound1 = 1.0 / (C ** 0.5)
    w1 = jax.random.uniform(kw1, (C, MIDDLE), jnp.float32, -bound1, bound1)
    b1 = jax.random.uniform(kb1, (1, MIDDLE), jnp.float32, -bound1, bound1)

    # nn.Linear(middle, out_c): weight (out_c, middle); w2 = weight.T
    bound2 = 1.0 / (MIDDLE ** 0.5)
    w2 = jax.random.uniform(kw2, (MIDDLE, C), jnp.float32, -bound2, bound2)
    b2 = jax.random.uniform(kb2, (1, C), jnp.float32, -bound2, bound2)

    out = selective_kernel_forward(sk_conv1, sk_conv2, sk_conv3,
                                   w1, b1, w2, b2)
    out = jax.block_until_ready(out)

    ref = _reference_forward(sk_conv1, sk_conv2, sk_conv3, w1, b1, w2, b2)
    assert out.shape == (B, C, H, W)
    assert jnp.allclose(out, ref, atol=1e-5, rtol=1e-5), "mismatch vs reference"

    print("KERNEL_OK")
</pallas_src>

<mosaic_0001>
module attributes {stable_mosaic.version = 11 : i64} {
  func.func @_selective_kernel_body(%arg0: i32, %arg1: memref<8x256xf32, #tpu.memory_space<vmem>>, %arg2: memref<8x256xf32, #tpu.memory_space<vmem>>, %arg3: memref<8x256xf32, #tpu.memory_space<vmem>>, %arg4: memref<8x32xf32, #tpu.memory_space<vmem>>, %arg5: memref<1x32xf32, #tpu.memory_space<vmem>>, %arg6: memref<32x4xf32, #tpu.memory_space<vmem>>, %arg7: memref<1x4xf32, #tpu.memory_space<vmem>>, %arg8: memref<2x8xf32, #tpu.memory_space<vmem>>, %arg9: memref<8x2xf32, #tpu.memory_space<vmem>>, %arg10: memref<8x4xf32, #tpu.memory_space<vmem>>, %arg11: memref<8x256xf32, #tpu.memory_space<vmem>>) attributes {dimension_semantics = [#tpu.dimension_semantics<parallel>], iteration_bounds = array<i64: 1>, scalar_prefetch = 0 : i64, scratch_operands = 0 : i64, tpu.core_type = #tpu.core_type<tc>, window_params = [{transform_indices = @transform_0, window_bounds = array<i64: 8, 256>}, {transform_indices = @transform_1, window_bounds = array<i64: 8, 256>}, {transform_indices = @transform_2, window_bounds = array<i64: 8, 256>}, {pipeline_mode = #tpu.pipeline_mode<synchronous>, transform_indices = @transform_3, window_bounds = array<i64: 8, 32>}, {pipeline_mode = #tpu.pipeline_mode<synchronous>, transform_indices = @transform_4, window_bounds = array<i64: 1, 32>}, {pipeline_mode = #tpu.pipeline_mode<synchronous>, transform_indices = @transform_5, window_bounds = array<i64: 32, 4>}, {pipeline_mode = #tpu.pipeline_mode<synchronous>, transform_indices = @transform_6, window_bounds = array<i64: 1, 4>}, {pipeline_mode = #tpu.pipeline_mode<synchronous>, transform_indices = @transform_7, window_bounds = array<i64: 2, 8>}, {pipeline_mode = #tpu.pipeline_mode<synchronous>, transform_indices = @transform_8, window_bounds = array<i64: 8, 2>}, {pipeline_mode = #tpu.pipeline_mode<synchronous>, transform_indices = @transform_9, window_bounds = array<i64: 8, 4>}, {transform_indices = @transform_10, window_bounds = array<i64: 8, 256>}]} {
    %c0 = arith.constant 0 : index
    %c0_0 = arith.constant 0 : index
    %0 = vector.load %arg1[%c0, %c0_0] : memref<8x256xf32, #tpu.memory_space<vmem>>, vector<8x256xf32>
    %c0_1 = arith.constant 0 : index
    %c0_2 = arith.constant 0 : index
    %1 = vector.load %arg2[%c0_1, %c0_2] : memref<8x256xf32, #tpu.memory_space<vmem>>, vector<8x256xf32>
    %c0_3 = arith.constant 0 : index
    %c0_4 = arith.constant 0 : index
    %2 = vector.load %arg3[%c0_3, %c0_4] : memref<8x256xf32, #tpu.memory_space<vmem>>, vector<8x256xf32>
    %3 = arith.addf %0, %1 : vector<8x256xf32>
    %4 = arith.addf %3, %2 : vector<8x256xf32>
    %cst = arith.constant dense<0.000000e+00> : vector<8xf32>
    %5 = vector.multi_reduction <add>, %4, %cst [1] : vector<8x256xf32> to vector<8xf32>
    %6 = vector.shape_cast %5 : vector<8xf32> to vector<8x1xf32>
    %cst_5 = arith.constant 3.906250e-03 : f32
    %7 = vector.broadcast %cst_5 : f32 to vector<8x1xf32>
    %8 = arith.mulf %6, %7 : vector<8x1xf32>
    %c0_6 = arith.constant 0 : index
    %c0_7 = arith.constant 0 : index
    %9 = vector.load %arg4[%c0_6, %c0_7] : memref<8x32xf32, #tpu.memory_space<vmem>>, vector<8x32xf32>
    %10 = vector.broadcast %8 : vector<8x1xf32> to vector<8x32xf32>
    %11 = arith.mulf %10, %9 : vector<8x32xf32>
    %c0_8 = arith.constant 0 : index
    %c0_9 = arith.constant 0 : index
    %12 = vector.load %arg8[%c0_8, %c0_9] : memref<2x8xf32, #tpu.memory_space<vmem>>, vector<2x8xf32>
    %cst_10 = arith.constant dense<0.000000e+00> : vector<2x32xf32>
    %13 = tpu.matmul %12, %11, %cst_10 {dimension_numbers = #tpu.dot_dimension_numbers<[1], [0], [0], [1], [0, 0, 1, 1], [], []>} : vector<2x8xf32>, vector<8x32xf32>, vector<2x32xf32> -> vector<2x32xf32>
    %c0_11 = arith.constant 0 : index
    %c0_12 = arith.constant 0 : index
    %14 = vector.load %arg5[%c0_11, %c0_12] : memref<1x32xf32, #tpu.memory_space<vmem>>, vector<1x32xf32>
    %15 = vector.broadcast %14 : vector<1x32xf32> to vector<2x32xf32>
    %16 = arith.addf %13, %15 : vector<2x32xf32>
    %cst_13 = arith.constant 0.000000e+00 : f32
    %17 = vector.broadcast %cst_13 : f32 to vector<2x32xf32>
    %18 = arith.maximumf %16, %17 : vector<2x32xf32>
    %c0_14 = arith.constant 0 : index
    %c0_15 = arith.constant 0 : index
    %19 = vector.load %arg6[%c0_14, %c0_15] : memref<32x4xf32, #tpu.memory_space<vmem>>, vector<32x4xf32>
    %cst_16 = arith.constant dense<0.000000e+00> : vector<2x4xf32>
    %20 = tpu.matmul %18, %19, %cst_16 {dimension_numbers = #tpu.dot_dimension_numbers<[1], [0], [0], [1], [0, 0, 1, 1], [], []>} : vector<2x32xf32>, vector<32x4xf32>, vector<2x4xf32> -> vector<2x4xf32>
    %c0_17 = arith.constant 0 : index
    %c0_18 = arith.constant 0 : index
    %21 = vector.load %arg7[%c0_17, %c0_18] : memref<1x4xf32, #tpu.memory_space<vmem>>, vector<1x4xf32>
    %22 = vector.broadcast %21 : vector<1x4xf32> to vector<2x4xf32>
    %23 = arith.addf %20, %22 : vector<2x4xf32>
    %cst_19 = arith.constant dense<0xFF800000> : vector<2xf32>
    %24 = vector.multi_reduction <maximumf>, %23, %cst_19 [1] : vector<2x4xf32> to vector<2xf32>
    %25 = vector.shape_cast %24 : vector<2xf32> to vector<2x1xf32>
    %26 = vector.broadcast %25 : vector<2x1xf32> to vector<2x4xf32>
    %27 = arith.subf %23, %26 : vector<2x4xf32>
    %28 = math.exp %27 : vector<2x4xf32>
    %cst_20 = arith.constant dense<0.000000e+00> : vector<2xf32>
    %29 = vector.multi_reduction <add>, %28, %cst_20 [1] : vector<2x4xf32> to vector<2xf32>
    %30 = vector.shape_cast %29 : vector<2xf32> to vector<2x1xf32>
    %cst_21 = arith.constant 3.000000e+00 : f32
    %31 = vector.broadcast %cst_21 : f32 to vector<2x1xf32>
    %32 = arith.mulf %31, %30 : vector<2x1xf32>
    %33 = vector.broadcast %32 : vector<2x1xf32> to vector<2x4xf32>
    %34 = arith.divf %28, %33 : vector<2x4xf32>
    %c0_22 = arith.constant 0 : index
    %c0_23 = arith.constant 0 : index
    %35 = vector.load %arg9[%c0_22, %c0_23] : memref<8x2xf32, #tpu.memory_space<vmem>>, vector<8x2xf32>
    %cst_24 = arith.constant dense<0.000000e+00> : vector<8x4xf32>
    %36 = tpu.matmul %35, %34, %cst_24 {dimension_numbers = #tpu.dot_dimension_numbers<[1], [0], [0], [1], [0, 0, 1, 1], [], []>} : vector<8x2xf32>, vector<2x4xf32>, vector<8x4xf32> -> vector<8x4xf32>
    %c0_25 = arith.constant 0 : index
    %c0_26 = arith.constant 0 : index
    %37 = vector.load %arg10[%c0_25, %c0_26] : memref<8x4xf32, #tpu.memory_space<vmem>>, vector<8x4xf32>
    %38 = arith.mulf %36, %37 : vector<8x4xf32>
    %cst_27 = arith.constant dense<0.000000e+00> : vector<8xf32>
    %39 = vector.multi_reduction <add>, %38, %cst_27 [1] : vector<8x4xf32> to vector<8xf32>
    %40 = vector.shape_cast %39 : vector<8xf32> to vector<8x1xf32>
    %41 = vector.broadcast %40 : vector<8x1xf32> to vector<8x256xf32>
    %42 = arith.mulf %4, %41 : vector<8x256xf32>
    %c0_28 = arith.constant 0 : index
    %c0_29 = arith.constant 0 : index
    %43 = vector.load %arg11[%c0_28, %c0_29] : memref<8x256xf32, #tpu.memory_space<vmem>>, vector<8x256xf32>
    tpu.vector_store %arg11[%c0_28, %c0_29], %42 {strides = array<i32>} : memref<8x256xf32, #tpu.memory_space<vmem>>, vector<8x256xf32>,
    return
  }
  func.func @transform_0(%arg0: i32) -> (i32, i32) {
    %c0_i32 = arith.constant 0 : i32
    %c0_i32_0 = arith.constant 0 : i32
    return %arg0, %c0_i32 : i32, i32
  }
  func.func @transform_1(%arg0: i32) -> (i32, i32) {
    %c0_i32 = arith.constant 0 : i32
    %c0_i32_0 = arith.constant 0 : i32
    return %arg0, %c0_i32 : i32, i32
  }
  func.func @transform_2(%arg0: i32) -> (i32, i32) {
    %c0_i32 = arith.constant 0 : i32
    %c0_i32_0 = arith.constant 0 : i32
    return %arg0, %c0_i32 : i32, i32
  }
  func.func @transform_3(%arg0: i32) -> (i32, i32) {
    %c0_i32 = arith.constant 0 : i32
    %c0_i32_0 = arith.constant 0 : i32
    %c0_i32_1 = arith.constant 0 : i32
    return %c0_i32, %c0_i32_0 : i32, i32
  }
  func.func @transform_4(%arg0: i32) -> (i32, i32) {
    %c0_i32 = arith.constant 0 : i32
    %c0_i32_0 = arith.constant 0 : i32
    %c0_i32_1 = arith.constant 0 : i32
    return %c0_i32, %c0_i32_0 : i32, i32
  }
  func.func @transform_5(%arg0: i32) -> (i32, i32) {
    %c0_i32 = arith.constant 0 : i32
    %c0_i32_0 = arith.constant 0 : i32
    %c0_i32_1 = arith.constant 0 : i32
    return %c0_i32, %c0_i32_0 : i32, i32
  }
  func.func @transform_6(%arg0: i32) -> (i32, i32) {
    %c0_i32 = arith.constant 0 : i32
    %c0_i32_0 = arith.constant 0 : i32
    %c0_i32_1 = arith.constant 0 : i32
    return %c0_i32, %c0_i32_0 : i32, i32
  }
  func.func @transform_7(%arg0: i32) -> (i32, i32) {
    %c0_i32 = arith.constant 0 : i32
    %c0_i32_0 = arith.constant 0 : i32
    %c0_i32_1 = arith.constant 0 : i32
    return %c0_i32, %c0_i32_0 : i32, i32
  }
  func.func @transform_8(%arg0: i32) -> (i32, i32) {
    %c0_i32 = arith.constant 0 : i32
    %c0_i32_0 = arith.constant 0 : i32
    %c0_i32_1 = arith.constant 0 : i32
    return %c0_i32, %c0_i32_0 : i32, i32
  }
  func.func @transform_9(%arg0: i32) -> (i32, i32) {
    %c0_i32 = arith.constant 0 : i32
    %c0_i32_0 = arith.constant 0 : i32
    %c0_i32_1 = arith.constant 0 : i32
    return %c0_i32, %c0_i32_0 : i32, i32
  }
  func.func @transform_10(%arg0: i32) -> (i32, i32) {
    %c0_i32 = arith.constant 0 : i32
    %c0_i32_0 = arith.constant 0 : i32
    return %arg0, %c0_i32 : i32, i32
  }
}

</mosaic_0001>

<llo_original>
// kernel: tpu_custom_call.1
$region0: #{tpu_custom_call.1}
  #allocation0 [shape = 'u32[]', space=smem, size = 0x4, offset = 0x4, fixed_abs, tag = 'smem constant byte address 0x4 - core index']
  #allocation1 [shape = 'u32[144,128]{1,0:T(1,128)}', space=vmem, size = 0x12000, scoped, tag = 'internal scratch']
  %s0 = inlined_call_operand.vmem [shape: f32[8,256], index: 0, kind: input, shape index: {}]
  %s1 = inlined_call_operand.vmem [shape: f32[8,256], index: 1, kind: input, shape index: {}]
  %s2 = inlined_call_operand.vmem [shape: f32[8,256], index: 2, kind: input, shape index: {}]
  %s3 = inlined_call_operand.vmem [shape: f32[8,32], index: 3, kind: input, shape index: {}]
  %s4 = inlined_call_operand.vmem [shape: f32[1,32], index: 4, kind: input, shape index: {}]
  %s5 = inlined_call_operand.vmem [shape: f32[32,4], index: 5, kind: input, shape index: {}]
  %s6 = inlined_call_operand.vmem [shape: f32[1,4], index: 6, kind: input, shape index: {}]
  %s7 = inlined_call_operand.vmem [shape: f32[2,8], index: 7, kind: input, shape index: {}]
  %s8 = inlined_call_operand.vmem [shape: f32[8,2], index: 8, kind: input, shape index: {}]
  %s9 = inlined_call_operand.vmem [shape: f32[8,4], index: 9, kind: input, shape index: {}]
  %s10 = inlined_call_operand.hbm [shape: f32[8,256], index: 10, kind: output, shape index: {}]
  %s11 = sld [smem:[#allocation0]]
  $region50: #{tpu_custom_call.1} parent=0
    _
  %s13 = ssub.s32 1, %s11
  %s14 = scalar_select 0, %s13, %s11
  $region1: #{tpu_custom_call.1} parent=0
    #allocation2 [shape = 'u8[8192]{0}', space=vmem, size = 0x2000, scoped, tag = 'output window, operand 0, single buffered']
    #allocation3 [shape = 's32[1]{0}', space=sflag, size = 0x4, scoped, tag = 'scoped memory for tpu_custom_call.1']
    %15 = vsyncpa [#allocation3], 0
    // Predicated region
    $region2: #{tpu_custom_call.1} parent=1 // pred_check
      _
    $region3: #{tpu_custom_call.1} parent=1 // pred_check_branch
      %17 = sbr.rel (0) target = $region5
    $region4: #{tpu_custom_call.1} parent=1 // pred_region
      _
    $region5: #{tpu_custom_call.1} parent=1 // pred_fallthru
      _
    // Predicated region
    $region6: #{tpu_custom_call.1} parent=1 // pred_check
      _
    $region7: #{tpu_custom_call.1} parent=1 // pred_check_branch
      %19 = sbr.rel (0) target = $region9
    $region8: #{tpu_custom_call.1} parent=1 // pred_region
      _
    $region9: #{tpu_custom_call.1} parent=1 // pred_fallthru
      _
    // Predicated region
    $region10: #{tpu_custom_call.1} parent=1 // pred_check
      _
    $region11: #{tpu_custom_call.1} parent=1 // pred_check_branch
      %21 = sbr.rel (0) target = $region13
    $region12: #{tpu_custom_call.1} parent=1 // pred_region
      _
    $region13: #{tpu_custom_call.1} parent=1 // pred_fallthru
      _
    // Predicated region
    $region14: #{tpu_custom_call.1} parent=1 // pred_check
      _
    $region15: #{tpu_custom_call.1} parent=1 // pred_check_branch
      %23 = sbr.rel (0) target = $region17
    $region16: #{tpu_custom_call.1} parent=1 // pred_region
      _
    $region17: #{tpu_custom_call.1} parent=1 // pred_fallthru
      _
    // Predicated region
    $region18: #{tpu_custom_call.1} parent=1 // pred_check
      _
    $region19: #{tpu_custom_call.1} parent=1 // pred_check_branch
      %25 = sbr.rel (0) target = $region21
    $region20: #{tpu_custom_call.1} parent=1 // pred_region
      _
    $region21: #{tpu_custom_call.1} parent=1 // pred_fallthru
      _
    // Predicated region
    $region22: #{tpu_custom_call.1} parent=1 // pred_check
      _
    $region23: #{tpu_custom_call.1} parent=1 // pred_check_branch
      %27 = sbr.rel (0) target = $region25
    $region24: #{tpu_custom_call.1} parent=1 // pred_region
      _
    $region25: #{tpu_custom_call.1} parent=1 // pred_fallthru
      _
    // Predicated region
    $region26: #{tpu_custom_call.1} parent=1 // pred_check
      _
    $region27: #{tpu_custom_call.1} parent=1 // pred_check_branch
      %29 = sbr.rel (0) target = $region29
    $region28: #{tpu_custom_call.1} parent=1 // pred_region
      _
    $region29: #{tpu_custom_call.1} parent=1 // pred_fallthru
      _
    // Predicated region
    $region30: #{tpu_custom_call.1} parent=1 // pred_check
      _
    $region31: #{tpu_custom_call.1} parent=1 // pred_check_branch
      %31 = sbr.rel (0) target = $region33
    $region32: #{tpu_custom_call.1} parent=1 // pred_region
      _
    $region33: #{tpu_custom_call.1} parent=1 // pred_fallthru
      _
    // Predicated region
    $region34: #{tpu_custom_call.1} parent=1 // pred_check
      _
    $region35: #{tpu_custom_call.1} parent=1 // pred_check_branch
      %33 = sbr.rel (0) target = $region37
    $region36: #{tpu_custom_call.1} parent=1 // pred_region
      _
    $region37: #{tpu_custom_call.1} parent=1 // pred_fallthru
      _
    // Predicated region
    $region38: #{tpu_custom_call.1} parent=1 // pred_check
      _
    $region39: #{tpu_custom_call.1} parent=1 // pred_check_branch
      %35 = sbr.rel (0) target = $region41
    $region40: #{tpu_custom_call.1} parent=1 // pred_region
      _
    $region41: #{tpu_custom_call.1} parent=1 // pred_fallthru
      _
    %v36 = vld [vmem:[%s0] sm:$0xff]
    %v37 = vld [vmem:[%s0 + $0x8] sm:$0xff]
    %v38 = vld [vmem:[%s1] sm:$0xff]
    %v39 = vld [vmem:[%s1 + $0x8] sm:$0xff]
    %v40 = vld [vmem:[%s2] sm:$0xff]
    %v41 = vld [vmem:[%s2 + $0x8] sm:$0xff]
    %v42 = vadd.f32 %v36, %v38
    %v43 = vadd.f32 %v37, %v39
    %v44 = vadd.f32 %v42, %v40
    %v45 = vadd.f32 %v43, %v41
    %v46 = vadd.f32 %v44, %v45
    %47 = vadd.xlane.f32.xlu0 %v46
    %v48 = vpop.xlane.xlu0 %47
    %v49 = vmul.f32 %v48, 0.00390625
    %v50 = vld [vmem:[%s3] sm:$0xff]
    %v51 = vmul.f32 %v49, %v50
    %v52 = vld [vmem:[%s7] sm:$0x3]
    %v53 = vld [vmem:[%s4] sm:$0x1]
    %v55 = vlaneseq
    %v56 = vshrl.u32 %v55, 7
    %v57 = vsub.s32 0, %v56
    %v58 = vrot.slane %v53, %v57
    %vm60 = vcmask 64512
    %v62 = vsel %vm60, %v52, 0
    %64 = vmatprep.subr.mxu0 0.0
    %65 = vmatpush1.msra.mxu0 %v51
    %66 = vmatprep.subr.mxu0 0.0
    %67 = vmatpush1.msra.mxu0 0.0
    %68 = vmatprep.subr.mxu0 0.0
    %69 = vmatpush1.msra.mxu0 0.0
    %70 = vmatprep.subr.mxu0 0.0
    %71 = vmatpush1.msra.mxu0 0.0
    %72 = vmatprep.subr.mxu0 0.0
    %73 = vmatpush1.msra.mxu0 0.0
    %74 = vmatprep.subr.mxu0 0.0
    %75 = vmatpush1.msra.mxu0 0.0
    %76 = vmatprep.subr.mxu0 0.0
    %77 = vmatpush1.msra.mxu0 0.0
    %78 = vmatprep.subr.mxu0 0.0
    %79 = vmatpush1.msra.mxu0 0.0
    %80 = vmatprep.subr.mxu0 0.0
    %81 = vmatpush1.msra.mxu0 0.0
    %82 = vmatprep.subr.mxu0 0.0
    %83 = vmatpush1.msra.mxu0 0.0
    %84 = vmatprep.subr.mxu0 0.0
    %85 = vmatpush1.msra.mxu0 0.0
    %86 = vmatprep.subr.mxu0 0.0
    %87 = vmatpush1.msra.mxu0 0.0
    %88 = vmatprep.subr.mxu0 0.0
    %89 = vmatpush1.msra.mxu0 0.0
    %90 = vmatprep.subr.mxu0 0.0
    %91 = vmatpush1.msra.mxu0 0.0
    %92 = vmatprep.subr.mxu0 0.0
    %93 = vmatpush1.msra.mxu0 0.0
    %94 = vmatprep.subr.mxu0 0.0
    %95 = vmatpush1.msra.mxu0 0.0
    %96 = vmatprep.subr.mxu0 0.0
    %97 = vmatpush1.msra.mxu0 0.0
    %98 = vmatprep.subr.mxu0 0.0
    %99 = vmatpush1.msra.mxu0 0.0
    %100 = vmatprep.subr.mxu0 0.0
    %101 = vmatpush1.msra.mxu0 0.0
    %102 = vmatprep.subr.mxu0 0.0
    %103 = vmatpush1.msra.mxu0 0.0
    %104 = vmatprep.subr.mxu0 0.0
    %105 = vmatpush1.msra.mxu0 0.0
    %106 = vmatprep.subr.mxu0 0.0
    %107 = vmatpush1.msra.mxu0 0.0
    %108 = vmatprep.subr.mxu0 0.0
    %109 = vmatpush1.msra.mxu0 0.0
    %110 = vmatprep.subr.mxu0 0.0
    %111 = vmatpush1.msra.mxu0 0.0
    %112 = vmatprep.subr.mxu0 0.0
    %113 = vmatpush1.msra.mxu0 0.0
    %114 = vmatprep.subr.mxu0 0.0
    %115 = vmatpush1.msra.mxu0 0.0
    %116 = vmatprep.subr.mxu0 0.0
    %117 = vmatpush1.msra.mxu0 0.0
    %118 = vmatprep.subr.mxu0 0.0
    %119 = vmatpush1.msra.mxu0 0.0
    %120 = vmatprep.subr.mxu0 0.0
    %121 = vmatpush1.msra.mxu0 0.0
    %122 = vmatprep.subr.mxu0 0.0
    %123 = vmatpush1.msra.mxu0 0.0
    %124 = vmatprep.subr.mxu0 0.0
    %125 = vmatpush1.msra.mxu0 0.0
    %126 = vmatprep.subr.mxu0 0.0
    %127 = vmatpush1.msra.mxu0 0.0
    %128 = vmatprep.mubr.f32.mxu0 0.0
    %129 = vmatmul.mubr.f32.gmra.mrb[0].mxu0 %v62
    %v130 = vpop.f32.mrb[0].mxu0
    %v131 = vadd.f32 %v58, %v130
    %v132 = vpop.f32.mrb[0].mxu0
    %133 = vdwg.mxu0
    %v134 = vmax.f32 %v131, 0.0
    %v135 = vld [vmem:[%s5] sm:$0xff]
    %v136 = vld [vmem:[%s5 + $0x8] sm:$0xff]
    %v137 = vld [vmem:[%s5 + $0x10] sm:$0xff]
    %v138 = vld [vmem:[%s5 + $0x18] sm:$0xff]
    %v139 = vld [vmem:[%s6] sm:$0x1]
    %v141 = vlaneseq
    %v142 = vshrl.u32 %v141, 7
    %v143 = vsub.s32 0, %v142
    %v144 = vrot.slane %v139, %v143
    %vm146 = vcmask 261120
    %v148 = vsel %vm146, %v134, 0
    %150 = vmatprep.subr.mxu0 0.0
    %151 = vmatpush1.msra.mxu0 %v135
    %152 = vmatprep.subr.mxu0 0.0
    %153 = vmatpush1.msra.mxu0 %v136
    %154 = vmatprep.subr.mxu0 0.0
    %155 = vmatpush1.msra.mxu0 %v137
    %156 = vmatprep.subr.mxu0 0.0
    %157 = vmatpush1.msra.mxu0 %v138
    %158 = vmatprep.subr.mxu0 0.0
    %159 = vmatpush1.msra.mxu0 0.0
    %160 = vmatprep.subr.mxu0 0.0
    %161 = vmatpush1.msra.mxu0 0.0
    %162 = vmatprep.subr.mxu0 0.0
    %163 = vmatpush1.msra.mxu0 0.0
    %164 = vmatprep.subr.mxu0 0.0
    %165 = vmatpush1.msra.mxu0 0.0
    %166 = vmatprep.subr.mxu0 0.0
    %167 = vmatpush1.msra.mxu0 0.0
    %168 = vmatprep.subr.mxu0 0.0
    %169 = vmatpush1.msra.mxu0 0.0
    %170 = vmatprep.subr.mxu0 0.0
    %171 = vmatpush1.msra.mxu0 0.0
    %172 = vmatprep.subr.mxu0 0.0
    %173 = vmatpush1.msra.mxu0 0.0
    %174 = vmatprep.subr.mxu0 0.0
    %175 = vmatpush1.msra.mxu0 0.0
    %176 = vmatprep.subr.mxu0 0.0
    %177 = vmatpush1.msra.mxu0 0.0
    %178 = vmatprep.subr.mxu0 0.0
    %179 = vmatpush1.msra.mxu0 0.0
    %180 = vmatprep.subr.mxu0 0.0
    %181 = vmatpush1.msra.mxu0 0.0
    %182 = vmatprep.subr.mxu0 0.0
    %183 = vmatpush1.msra.mxu0 0.0
    %184 = vmatprep.subr.mxu0 0.0
    %185 = vmatpush1.msra.mxu0 0.0
    %186 = vmatprep.subr.mxu0 0.0
    %187 = vmatpush1.msra.mxu0 0.0
    %188 = vmatprep.subr.mxu0 0.0
    %189 = vmatpush1.msra.mxu0 0.0
    %190 = vmatprep.subr.mxu0 0.0
    %191 = vmatpush1.msra.mxu0 0.0
    %192 = vmatprep.subr.mxu0 0.0
    %193 = vmatpush1.msra.mxu0 0.0
    %194 = vmatprep.subr.mxu0 0.0
    %195 = vmatpush1.msra.mxu0 0.0
    %196 = vmatprep.subr.mxu0 0.0
    %197 = vmatpush1.msra.mxu0 0.0
    %198 = vmatprep.subr.mxu0 0.0
    %199 = vmatpush1.msra.mxu0 0.0
    %200 = vmatprep.subr.mxu0 0.0
    %201 = vmatpush1.msra.mxu0 0.0
    %202 = vmatprep.subr.mxu0 0.0
    %203 = vmatpush1.msra.mxu0 0.0
    %204 = vmatprep.subr.mxu0 0.0
    %205 = vmatpush1.msra.mxu0 0.0
    %206 = vmatprep.subr.mxu0 0.0
    %207 = vmatpush1.msra.mxu0 0.0
    %208 = vmatprep.subr.mxu0 0.0
    %209 = vmatpush1.msra.mxu0 0.0
    %210 = vmatprep.subr.mxu0 0.0
    %211 = vmatpush1.msra.mxu0 0.0
    %212 = vmatprep.subr.mxu0 0.0
    %213 = vmatpush1.msra.mxu0 0.0
    %214 = vmatprep.mubr.f32.mxu0 0.0
    %215 = vmatmul.mubr.f32.gmra.mrb[0].mxu0 %v148
    %v216 = vpop.f32.mrb[0].mxu0
    %v217 = vadd.f32 %v144, %v216
    %v218 = vpop.f32.mrb[0].mxu0
    %219 = vdwg.mxu0
    %vm220 = vcmask 25600
    %v221 = vsel %vm220, %v217, -inf
    %222 = vmax.xlane.f32.xlu0 %v221
    %v223 = vpop.xlane.xlu0 %222
    %v224 = vsub.f32 %v217, %v223
    %v225 = vmul.f32 %v224, 1.442695
    %v226 = vpow.pop %v225
    %v227 = vsel %vm220, %v226, 0.0
    %228 = vadd.xlane.f32.xlu0 %v227
    %v229 = vpop.xlane.xlu0 %228
    %v230 = vmul.f32 %v229, 3.0
    %v231 = vrcp.pop %v230
    %v232 = vmul.f32 %v226, %v231
    %v233 = vld [vmem:[%s8] sm:$0xff]
    %vm234 = vcmask 15360
    %v236 = vsel %vm234, %v233, 0
    %vm238 = vcmask 1041408
    %v240 = vsel %vm238, %v232, 0
    %242 = vmatprep.subr.mxu0 0.0
    %243 = vmatpush1.msra.mxu0 %v240
    %244 = vmatprep.subr.mxu0 0.0
    %245 = vmatpush1.msra.mxu0 0.0
    %246 = vmatprep.subr.mxu0 0.0
    %247 = vmatpush1.msra.mxu0 0.0
    %248 = vmatprep.subr.mxu0 0.0
    %249 = vmatpush1.msra.mxu0 0.0
    %250 = vmatprep.subr.mxu0 0.0
    %251 = vmatpush1.msra.mxu0 0.0
    %252 = vmatprep.subr.mxu0 0.0
    %253 = vmatpush1.msra.mxu0 0.0
    %254 = vmatprep.subr.mxu0 0.0
    %255 = vmatpush1.msra.mxu0 0.0
    %256 = vmatprep.subr.mxu0 0.0
    %257 = vmatpush1.msra.mxu0 0.0
    %258 = vmatprep.subr.mxu0 0.0
    %259 = vmatpush1.msra.mxu0 0.0
    %260 = vmatprep.subr.mxu0 0.0
    %261 = vmatpush1.msra.mxu0 0.0
    %262 = vmatprep.subr.mxu0 0.0
    %263 = vmatpush1.msra.mxu0 0.0
    %264 = vmatprep.subr.mxu0 0.0
    %265 = vmatpush1.msra.mxu0 0.0
    %266 = vmatprep.subr.mxu0 0.0
    %267 = vmatpush1.msra.mxu0 0.0
    %268 = vmatprep.subr.mxu0 0.0
    %269 = vmatpush1.msra.mxu0 0.0
    %270 = vmatprep.subr.mxu0 0.0
    %271 = vmatpush1.msra.mxu0 0.0
    %272 = vmatprep.subr.mxu0 0.0
    %273 = vmatpush1.msra.mxu0 0.0
    %274 = vmatprep.subr.mxu0 0.0
    %275 = vmatpush1.msra.mxu0 0.0
    %276 = vmatprep.subr.mxu0 0.0
    %277 = vmatpush1.msra.mxu0 0.0
    %278 = vmatprep.subr.mxu0 0.0
    %279 = vmatpush1.msra.mxu0 0.0
    %280 = vmatprep.subr.mxu0 0.0
    %281 = vmatpush1.msra.mxu0 0.0
    %282 = vmatprep.subr.mxu0 0.0
    %283 = vmatpush1.msra.mxu0 0.0
    %284 = vmatprep.subr.mxu0 0.0
    %285 = vmatpush1.msra.mxu0 0.0
    %286 = vmatprep.subr.mxu0 0.0
    %287 = vmatpush1.msra.mxu0 0.0
    %288 = vmatprep.subr.mxu0 0.0
    %289 = vmatpush1.msra.mxu0 0.0
    %290 = vmatprep.subr.mxu0 0.0
    %291 = vmatpush1.msra.mxu0 0.0
    %292 = vmatprep.subr.mxu0 0.0
    %293 = vmatpush1.msra.mxu0 0.0
    %294 = vmatprep.subr.mxu0 0.0
    %295 = vmatpush1.msra.mxu0 0.0
    %296 = vmatprep.subr.mxu0 0.0
    %297 = vmatpush1.msra.mxu0 0.0
    %298 = vmatprep.subr.mxu0 0.0
    %299 = vmatpush1.msra.mxu0 0.0
    %300 = vmatprep.subr.mxu0 0.0
    %301 = vmatpush1.msra.mxu0 0.0
    %302 = vmatprep.subr.mxu0 0.0
    %303 = vmatpush1.msra.mxu0 0.0
    %304 = vmatprep.subr.mxu0 0.0
    %305 = vmatpush1.msra.mxu0 0.0
    %306 = vmatprep.mubr.f32.mxu0 0.0
    %307 = vmatmul.mubr.f32.gmra.mrb[0].mxu0 %v236
    %v308 = vpop.f32.mrb[0].mxu0
    %v309 = vadd.f32 0.0, %v308
    %v310 = vpop.f32.mrb[0].mxu0
    %311 = vdwg.mxu0
    %v312 = vld [vmem:[%s9] sm:$0xff]
    %v313 = vmul.f32 %v309, %v312
    %vm314 = vcmask 31744
    %v315 = vsel %vm314, %v313, 0.0
    %316 = vadd.xlane.f32.xlu0 %v315
    %v317 = vpop.xlane.xlu0 %316
    %v318 = vmul.f32 %v44, %v317
    %v319 = vmul.f32 %v45, %v317
    %320 = vst [vmem:[#allocation2] sm:$0xff] %v318
    %321 = vst [vmem:[#allocation2 + $0x8] sm:$0xff] %v319
    // Predicated region
    $region42: #{tpu_custom_call.1} parent=1 // pred_check
      _
    $region43: #{tpu_custom_call.1} parent=1 // pred_check_branch
      %323 = sbr.rel (0) target = $region45
    $region44: #{tpu_custom_call.1} parent=1 // pred_region
      %s325 = ssub.s32 256, 256
      %326 = vsyncadd [#allocation3], %s325
      %s328 = sshll.u32 [#allocation2], 4
      %s329 = int_to_ptr.vmem [resolvable:$true] %s328
      %331 = dma.vmem_to_hbm [thread:$0]  %s329, 256, %s10, [#allocation3]
    $region45: #{tpu_custom_call.1} parent=1 // pred_fallthru
      _
    // Predicated region
    $region46: #{tpu_custom_call.1} parent=1 // pred_check
      _
    $region47: #{tpu_custom_call.1} parent=1 // pred_check_branch
      %333 = sbr.rel (0) target = $region49
    $region48: #{tpu_custom_call.1} parent=1 // pred_region
      %334 = dma.done [#allocation3], 256
    $region49: #{tpu_custom_call.1} parent=1 // pred_fallthru
      _
    %335 = vsyncpa [#allocation3], 1

</llo_original>
